<compile_context>
chip_gen: v6e
topology: v6e:2x2x1
jax: 0.10.0
libtpu: 0.0.40
codegen_flags: <defaults>
</compile_context>

<pallas_src>
import jax
import jax.numpy as jnp
from jax.experimental import pallas as pl
from jax.experimental.pallas import tpu as pltpu


def _round_up(x, m):
    return (x + m - 1) // m * m


# ---------- Pass 1: conv-as-matmul, per-channel sum / sumsq only ----------
def _stats_kernel(x_ref, w_ref, sum_ref, sumsq_ref):
    i = pl.program_id(0)
    y = jnp.dot(x_ref[...], w_ref[...], preferred_element_type=jnp.float32)

    @pl.when(i == 0)
    def _():
        sum_ref[...] = jnp.zeros_like(sum_ref)
        sumsq_ref[...] = jnp.zeros_like(sumsq_ref)

    sum_ref[...] += jnp.sum(y, axis=0, keepdims=True)
    sumsq_ref[...] += jnp.sum(y * y, axis=0, keepdims=True)
    # TODO(synk): for v7x megacore, restructure as per-chunk partial sums so this
    # axis can be "parallel"; also fixes E[y^2]-mean^2 drift at very large M.


# ---------- Pass 2: recompute conv fused with BN affine (scale/bias) + ReLU ----------
def _conv_bn_relu_kernel(x_ref, w_ref, scale_ref, bias_ref, o_ref):
    y = jnp.dot(x_ref[...], w_ref[...], preferred_element_type=jnp.float32)
    o_ref[...] = jnp.maximum(y * scale_ref[...] + bias_ref[...], 0.0).astype(o_ref.dtype)


def unit3d_forward(x_ncdhw, conv_weight, *, eps=1e-5, tm=512,
                   compute_dtype=jnp.bfloat16):
    """x_ncdhw: (N, Cin, D, H, W) float32. conv_weight: (Cout, Cin, 1, 1, 1)."""
    N, Cin, D, H, W = x_ncdhw.shape
    Cout = conv_weight.shape[0]
    assert conv_weight.shape == (Cout, Cin, 1, 1, 1), "only 1x1x1 conv supported"

    M = N * D * H * W

    # Layout glue: channels-last, rows = N*D*H*W.
    # TODO(synk): keep activations NDHWC across the whole model to drop these
    # host-side transposes (each is an extra HBM pass done by XLA).
    x2d = jnp.transpose(x_ncdhw, (0, 2, 3, 4, 1)).reshape(M, Cin).astype(compute_dtype)
    w2d = conv_weight.reshape(Cout, Cin).T.astype(compute_dtype)  # (Cin, Cout)

    # Lane-dense output channels for real I3D widths; skip for tiny Cout where
    # padding would inflate HBM traffic more than masked stores cost.
    Cout_p = _round_up(Cout, 128) if Cout >= 128 else Cout
    if Cout_p != Cout:
        w2d = jnp.pad(w2d, ((0, 0), (0, Cout_p - Cout)))

    # Tail handling: zero-pad rows up to the tile (zero rows contribute nothing
    # to sum/sumsq and we normalize by the real M).
    tm = min(tm, _round_up(M, 8))
    Mp = _round_up(M, tm)
    if Mp != M:
        x2d = jnp.pad(x2d, ((0, Mp - M), (0, 0)))

    grid = (Mp // tm,)
    vmem_cap = 64 * 1024 * 1024  # safe on v5e/v6e (128 MiB) and v7x (64 MiB)
    cparams_seq = pltpu.CompilerParams(
        dimension_semantics=("arbitrary",), vmem_limit_bytes=vmem_cap)
    cparams_par = pltpu.CompilerParams(
        dimension_semantics=("parallel",), vmem_limit_bytes=vmem_cap)

    # Pass 1: per-channel batch statistics (no y intermediate written to HBM).
    csum, csumsq = pl.pallas_call(
        _stats_kernel,
        out_shape=(
            jax.ShapeDtypeStruct((1, Cout_p), jnp.float32),
            jax.ShapeDtypeStruct((1, Cout_p), jnp.float32),
        ),
        grid_spec=pltpu.PrefetchScalarGridSpec(
            num_scalar_prefetch=0,
            grid=grid,
            in_specs=[
                pl.BlockSpec((tm, Cin), lambda i: (i, 0)),
                pl.BlockSpec((Cin, Cout_p), lambda i: (0, 0)),
            ],
            out_specs=[
                pl.BlockSpec((1, Cout_p), lambda i: (0, 0)),
                pl.BlockSpec((1, Cout_p), lambda i: (0, 0)),
            ],
        ),
        compiler_params=cparams_seq,
    )(x2d, w2d)

    # Tiny JAX glue: fold batch stats + (gamma=1, beta=0) into one scale/bias
    # pair, so pass 2 is a single FMA per element.
    count = jnp.float32(M)
    mean = csum / count
    var = csumsq / count - mean * mean  # biased variance, as PyTorch BN (train)
    scale = jax.lax.rsqrt(var + eps)
    bias = -mean * scale

    # Pass 2: recompute the 1x1x1 conv fused with BN + ReLU.
    out2d = pl.pallas_call(
        _conv_bn_relu_kernel,
        out_shape=jax.ShapeDtypeStruct((Mp, Cout_p), jnp.float32),
        grid_spec=pltpu.PrefetchScalarGridSpec(
            num_scalar_prefetch=0,
            grid=grid,
            in_specs=[
                pl.BlockSpec((tm, Cin), lambda i: (i, 0)),
                pl.BlockSpec((Cin, Cout_p), lambda i: (0, 0)),
                pl.BlockSpec((1, Cout_p), lambda i: (0, 0)),
                pl.BlockSpec((1, Cout_p), lambda i: (0, 0)),
            ],
            out_specs=pl.BlockSpec((tm, Cout_p), lambda i: (i, 0)),
        ),
        compiler_params=cparams_par,
    )(x2d, w2d, scale, bias)

    out = out2d[:M, :Cout].reshape(N, D, H, W, Cout)
    return jnp.transpose(out, (0, 4, 1, 2, 3))


def unit3d_reference(x_ncdhw, conv_weight, *, eps=1e-5):
    """Pure-JAX (full f32) reference matching PyTorch Unit3D in training mode."""
    y = jax.lax.conv_general_dilated(
        x_ncdhw, conv_weight, window_strides=(1, 1, 1), padding="VALID",
        dimension_numbers=("NCDHW", "OIDHW", "NCDHW"))
    mean = jnp.mean(y, axis=(0, 2, 3, 4), keepdims=True)
    var = jnp.mean((y - mean) ** 2, axis=(0, 2, 3, 4), keepdims=True)
    return jnp.maximum((y - mean) / jnp.sqrt(var + eps), 0.0)


if __name__ == "__main__":
    key = jax.random.PRNGKey(0)
    kx, kw = jax.random.split(key)

    N, Cin, Cout, D, H, W = 2, 4, 8, 4, 8, 8
    x = jax.random.normal(kx, (N, Cin, D, H, W), dtype=jnp.float32)

    # Deterministic kaiming_normal_ init: std = sqrt(2 / fan_in), fan_in = Cin*1*1*1
    fan_in = Cin * 1 * 1 * 1
    w = jax.random.normal(kw, (Cout, Cin, 1, 1, 1), dtype=jnp.float32) * jnp.sqrt(2.0 / fan_in)

    out = jax.block_until_ready(unit3d_forward(x, w))
    ref = jax.block_until_ready(unit3d_reference(x, w))

    assert out.shape == (N, Cout, D, H, W), out.shape
    # bf16 conv inputs (f32 MXU accumulate) vs full-f32 reference: tolerance set
    # to cover bf16 input quantization only.
    err = float(jnp.abs(out - ref).max())
    assert jnp.allclose(out, ref, atol=5e-2, rtol=5e-2), err

    # Second shape: exercises the M % tm != 0 tail-padding path.
    x2 = jax.random.normal(kx, (1, Cin, 3, 7, 5), dtype=jnp.float32)
    out2 = jax.block_until_ready(unit3d_forward(x2, w))
    ref2 = jax.block_until_ready(unit3d_reference(x2, w))
    assert out2.shape == (1, Cout, 3, 7, 5), out2.shape
    err2 = float(jnp.abs(out2 - ref2).max())
    assert jnp.allclose(out2, ref2, atol=5e-2, rtol=5e-2), err2

    print("KERNEL_OK")
</pallas_src>

<mosaic_0001>
module attributes {stable_mosaic.version = 11 : i64} {
  func.func @_stats_kernel(%arg0: i32, %arg1: memref<512x4xbf16, #tpu.memory_space<vmem>>, %arg2: memref<4x8xbf16, #tpu.memory_space<vmem>>, %arg3: memref<1x8xf32, #tpu.memory_space<vmem>>, %arg4: memref<1x8xf32, #tpu.memory_space<vmem>>) attributes {dimension_semantics = [#tpu.dimension_semantics<arbitrary>], iteration_bounds = array<i64: 1>, scalar_prefetch = 0 : i64, scratch_operands = 0 : i64, tpu.core_type = #tpu.core_type<tc>, window_params = [{transform_indices = @transform_0, window_bounds = array<i64: 512, 4>}, {pipeline_mode = #tpu.pipeline_mode<synchronous>, transform_indices = @transform_1, window_bounds = array<i64: 4, 8>}, {pipeline_mode = #tpu.pipeline_mode<synchronous>, transform_indices = @transform_2, window_bounds = array<i64: 1, 8>}, {pipeline_mode = #tpu.pipeline_mode<synchronous>, transform_indices = @transform_3, window_bounds = array<i64: 1, 8>}]} {
    %c0 = arith.constant 0 : index
    %c0_0 = arith.constant 0 : index
    %0 = vector.load %arg1[%c0, %c0_0] : memref<512x4xbf16, #tpu.memory_space<vmem>>, vector<512x4xbf16>
    %c0_1 = arith.constant 0 : index
    %c0_2 = arith.constant 0 : index
    %1 = vector.load %arg2[%c0_1, %c0_2] : memref<4x8xbf16, #tpu.memory_space<vmem>>, vector<4x8xbf16>
    %cst = arith.constant dense<0.000000e+00> : vector<512x8xf32>
    %2 = tpu.matmul %0, %1, %cst {dimension_numbers = #tpu.dot_dimension_numbers<[1], [0], [0], [1], [0, 0, 1, 1], [], []>} : vector<512x4xbf16>, vector<4x8xbf16>, vector<512x8xf32> -> vector<512x8xf32>
    %c0_i32 = arith.constant 0 : i32
    %3 = arith.cmpi eq, %arg0, %c0_i32 : i32
    %4 = arith.extui %3 : i1 to i32
    %c0_i32_3 = arith.constant 0 : i32
    %5 = arith.cmpi ne, %4, %c0_i32_3 : i32
    scf.if %5 {
      %cst_14 = arith.constant 0.000000e+00 : f32
      %17 = vector.broadcast %cst_14 : f32 to vector<1x8xf32>
      %c0_15 = arith.constant 0 : index
      %c0_16 = arith.constant 0 : index
      %18 = vector.load %arg3[%c0_15, %c0_16] : memref<1x8xf32, #tpu.memory_space<vmem>>, vector<1x8xf32>
      tpu.vector_store %arg3[%c0_15, %c0_16], %17 {strides = array<i32>} : memref<1x8xf32, #tpu.memory_space<vmem>>, vector<1x8xf32>,
      %cst_17 = arith.constant 0.000000e+00 : f32
      %19 = vector.broadcast %cst_17 : f32 to vector<1x8xf32>
      %c0_18 = arith.constant 0 : index
      %c0_19 = arith.constant 0 : index
      %20 = vector.load %arg4[%c0_18, %c0_19] : memref<1x8xf32, #tpu.memory_space<vmem>>, vector<1x8xf32>
      tpu.vector_store %arg4[%c0_18, %c0_19], %19 {strides = array<i32>} : memref<1x8xf32, #tpu.memory_space<vmem>>, vector<1x8xf32>,
    } else {
    }
    %c0_4 = arith.constant 0 : index
    %c0_5 = arith.constant 0 : index
    %6 = vector.load %arg3[%c0_4, %c0_5] : memref<1x8xf32, #tpu.memory_space<vmem>>, vector<1x8xf32>
    %cst_6 = arith.constant dense<0.000000e+00> : vector<8xf32>
    %7 = vector.multi_reduction <add>, %2, %cst_6 [0] : vector<512x8xf32> to vector<8xf32>
    %8 = vector.shape_cast %7 : vector<8xf32> to vector<1x8xf32>
    %9 = arith.addf %6, %8 : vector<1x8xf32>
    %c0_7 = arith.constant 0 : index
    %c0_8 = arith.constant 0 : index
    %10 = vector.load %arg3[%c0_7, %c0_8] : memref<1x8xf32, #tpu.memory_space<vmem>>, vector<1x8xf32>
    tpu.vector_store %arg3[%c0_7, %c0_8], %9 {strides = array<i32>} : memref<1x8xf32, #tpu.memory_space<vmem>>, vector<1x8xf32>,
    %c0_9 = arith.constant 0 : index
    %c0_10 = arith.constant 0 : index
    %11 = vector.load %arg4[%c0_9, %c0_10] : memref<1x8xf32, #tpu.memory_space<vmem>>, vector<1x8xf32>
    %12 = arith.mulf %2, %2 : vector<512x8xf32>
    %cst_11 = arith.constant dense<0.000000e+00> : vector<8xf32>
    %13 = vector.multi_reduction <add>, %12, %cst_11 [0] : vector<512x8xf32> to vector<8xf32>
    %14 = vector.shape_cast %13 : vector<8xf32> to vector<1x8xf32>
    %15 = arith.addf %11, %14 : vector<1x8xf32>
    %c0_12 = arith.constant 0 : index
    %c0_13 = arith.constant 0 : index
    %16 = vector.load %arg4[%c0_12, %c0_13] : memref<1x8xf32, #tpu.memory_space<vmem>>, vector<1x8xf32>
    tpu.vector_store %arg4[%c0_12, %c0_13], %15 {strides = array<i32>} : memref<1x8xf32, #tpu.memory_space<vmem>>, vector<1x8xf32>,
    return
  }
  func.func @transform_0(%arg0: i32) -> (i32, i32) {
    %c0_i32 = arith.constant 0 : i32
    %c0_i32_0 = arith.constant 0 : i32
    return %arg0, %c0_i32 : i32, i32
  }
  func.func @transform_1(%arg0: i32) -> (i32, i32) {
    %c0_i32 = arith.constant 0 : i32
    %c0_i32_0 = arith.constant 0 : i32
    %c0_i32_1 = arith.constant 0 : i32
    return %c0_i32, %c0_i32_0 : i32, i32
  }
  func.func @transform_2(%arg0: i32) -> (i32, i32) {
    %c0_i32 = arith.constant 0 : i32
    %c0_i32_0 = arith.constant 0 : i32
    %c0_i32_1 = arith.constant 0 : i32
    return %c0_i32, %c0_i32_0 : i32, i32
  }
  func.func @transform_3(%arg0: i32) -> (i32, i32) {
    %c0_i32 = arith.constant 0 : i32
    %c0_i32_0 = arith.constant 0 : i32
    %c0_i32_1 = arith.constant 0 : i32
    return %c0_i32, %c0_i32_0 : i32, i32
  }
}

</mosaic_0001>

<llo_original>
// kernel: tpu_custom_call.1
$region0: #{tpu_custom_call.1}
  #allocation0 [shape = 'u32[]', space=smem, size = 0x4, offset = 0x4, fixed_abs, tag = 'smem constant byte address 0x4 - core index']
  #allocation1 [shape = 'u32[144,128]{1,0:T(1,128)}', space=vmem, size = 0x12000, scoped, tag = 'internal scratch']
  %s0 = inlined_call_operand.vmem [shape: bf16[512,4], index: 0, kind: input, shape index: {}]
  %s1 = inlined_call_operand.vmem [shape: bf16[4,8], index: 1, kind: input, shape index: {}]
  %s2 = inlined_call_operand.hbm [shape: f32[1,8], index: 2, kind: output, shape index: {0}]
  %s3 = inlined_call_operand.hbm [shape: f32[1,8], index: 3, kind: output, shape index: {1}]
  %4 = xla_tuple %s2, %s3
  %s5 = sld [smem:[#allocation0]]
  $region30: #{tpu_custom_call.1} parent=0
    _
  %s7 = ssub.s32 1, %s5
  %s8 = scalar_select 0, %s7, %s5
  $region1: #{tpu_custom_call.1} parent=0
    #allocation2 [shape = 'u8[512]{0}', space=vmem, size = 0x400, scoped, tag = 'output window, operand 0, single buffered']
    #allocation3 [shape = 's32[1]{0}', space=sflag, size = 0x4, scoped, tag = 'scoped memory for tpu_custom_call.1']
    #allocation4 [shape = 'u8[512]{0}', space=vmem, size = 0x400, scoped, tag = 'output window, operand 1, single buffered']
    #allocation5 [shape = 's32[1]{0}', space=sflag, size = 0x4, scoped, tag = 'scoped memory for tpu_custom_call.1']
    %9 = vsyncpa [#allocation3], 0
    %10 = vsyncpa [#allocation5], 0
    // Predicated region
    $region2: #{tpu_custom_call.1} parent=1 // pred_check
      _
    $region3: #{tpu_custom_call.1} parent=1 // pred_check_branch
      %12 = sbr.rel (0) target = $region5
    $region4: #{tpu_custom_call.1} parent=1 // pred_region
      _
    $region5: #{tpu_custom_call.1} parent=1 // pred_fallthru
      _
    // Predicated region
    $region6: #{tpu_custom_call.1} parent=1 // pred_check
      _
    $region7: #{tpu_custom_call.1} parent=1 // pred_check_branch
      %14 = sbr.rel (0) target = $region9
    $region8: #{tpu_custom_call.1} parent=1 // pred_region
      _
    $region9: #{tpu_custom_call.1} parent=1 // pred_fallthru
      _
    %v16 = vld [vmem:[%s0] sm:$0xf]
    %v17 = vld [vmem:[%s0 + $0x4] sm:$0xf]
    %v18 = vld [vmem:[%s0 + $0x8] sm:$0xf]
    %v19 = vld [vmem:[%s0 + $0xc] sm:$0xf]
    %v20 = vld [vmem:[%s0 + $0x10] sm:$0xf]
    %v21 = vld [vmem:[%s0 + $0x14] sm:$0xf]
    %v22 = vld [vmem:[%s0 + $0x18] sm:$0xf]
    %v23 = vld [vmem:[%s0 + $0x1c] sm:$0xf]
    %v24 = vld [vmem:[%s0 + $0x20] sm:$0xf]
    %v25 = vld [vmem:[%s0 + $0x24] sm:$0xf]
    %v26 = vld [vmem:[%s0 + $0x28] sm:$0xf]
    %v27 = vld [vmem:[%s0 + $0x2c] sm:$0xf]
    %v28 = vld [vmem:[%s0 + $0x30] sm:$0xf]
    %v29 = vld [vmem:[%s0 + $0x34] sm:$0xf]
    %v30 = vld [vmem:[%s0 + $0x38] sm:$0xf]
    %v31 = vld [vmem:[%s0 + $0x3c] sm:$0xf]
    %v32 = vld [vmem:[%s0 + $0x40] sm:$0xf]
    %v33 = vld [vmem:[%s0 + $0x44] sm:$0xf]
    %v34 = vld [vmem:[%s0 + $0x48] sm:$0xf]
    %v35 = vld [vmem:[%s0 + $0x4c] sm:$0xf]
    %v36 = vld [vmem:[%s0 + $0x50] sm:$0xf]
    %v37 = vld [vmem:[%s0 + $0x54] sm:$0xf]
    %v38 = vld [vmem:[%s0 + $0x58] sm:$0xf]
    %v39 = vld [vmem:[%s0 + $0x5c] sm:$0xf]
    %v40 = vld [vmem:[%s0 + $0x60] sm:$0xf]
    %v41 = vld [vmem:[%s0 + $0x64] sm:$0xf]
    %v42 = vld [vmem:[%s0 + $0x68] sm:$0xf]
    %v43 = vld [vmem:[%s0 + $0x6c] sm:$0xf]
    %v44 = vld [vmem:[%s0 + $0x70] sm:$0xf]
    %v45 = vld [vmem:[%s0 + $0x74] sm:$0xf]
    %v46 = vld [vmem:[%s0 + $0x78] sm:$0xf]
    %v47 = vld [vmem:[%s0 + $0x7c] sm:$0xf]
    %v48 = vld [vmem:[%s0 + $0x80] sm:$0xf]
    %v49 = vld [vmem:[%s0 + $0x84] sm:$0xf]
    %v50 = vld [vmem:[%s0 + $0x88] sm:$0xf]
    %v51 = vld [vmem:[%s0 + $0x8c] sm:$0xf]
    %v52 = vld [vmem:[%s0 + $0x90] sm:$0xf]
    %v53 = vld [vmem:[%s0 + $0x94] sm:$0xf]
    %v54 = vld [vmem:[%s0 + $0x98] sm:$0xf]
    %v55 = vld [vmem:[%s0 + $0x9c] sm:$0xf]
    %v56 = vld [vmem:[%s0 + $0xa0] sm:$0xf]
    %v57 = vld [vmem:[%s0 + $0xa4] sm:$0xf]
    %v58 = vld [vmem:[%s0 + $0xa8] sm:$0xf]
    %v59 = vld [vmem:[%s0 + $0xac] sm:$0xf]
    %v60 = vld [vmem:[%s0 + $0xb0] sm:$0xf]
    %v61 = vld [vmem:[%s0 + $0xb4] sm:$0xf]
    %v62 = vld [vmem:[%s0 + $0xb8] sm:$0xf]
    %v63 = vld [vmem:[%s0 + $0xbc] sm:$0xf]
    %v64 = vld [vmem:[%s0 + $0xc0] sm:$0xf]
    %v65 = vld [vmem:[%s0 + $0xc4] sm:$0xf]
    %v66 = vld [vmem:[%s0 + $0xc8] sm:$0xf]
    %v67 = vld [vmem:[%s0 + $0xcc] sm:$0xf]
    %v68 = vld [vmem:[%s0 + $0xd0] sm:$0xf]
    %v69 = vld [vmem:[%s0 + $0xd4] sm:$0xf]
    %v70 = vld [vmem:[%s0 + $0xd8] sm:$0xf]
    %v71 = vld [vmem:[%s0 + $0xdc] sm:$0xf]
    %v72 = vld [vmem:[%s0 + $0xe0] sm:$0xf]
    %v73 = vld [vmem:[%s0 + $0xe4] sm:$0xf]
    %v74 = vld [vmem:[%s0 + $0xe8] sm:$0xf]
    %v75 = vld [vmem:[%s0 + $0xec] sm:$0xf]
    %v76 = vld [vmem:[%s0 + $0xf0] sm:$0xf]
    %v77 = vld [vmem:[%s0 + $0xf4] sm:$0xf]
    %v78 = vld [vmem:[%s0 + $0xf8] sm:$0xf]
    %v79 = vld [vmem:[%s0 + $0xfc] sm:$0xf]
    %v80 = vld [vmem:[%s1] sm:$0x3]
    %v145 = vunpack.c.l.b16 %v16
    %v146 = vunpack.c.l.b16 %v17
    %v147 = vunpack.c.l.b16 %v18
    %v148 = vunpack.c.l.b16 %v19
    %v149 = vunpack.c.l.b16 %v20
    %v150 = vunpack.c.l.b16 %v21
    %v151 = vunpack.c.l.b16 %v22
    %v152 = vunpack.c.l.b16 %v23
    %v153 = vunpack.c.l.b16 %v24
    %v154 = vunpack.c.l.b16 %v25
    %v155 = vunpack.c.l.b16 %v26
    %v156 = vunpack.c.l.b16 %v27
    %v157 = vunpack.c.l.b16 %v28
    %v158 = vunpack.c.l.b16 %v29
    %v159 = vunpack.c.l.b16 %v30
    %v160 = vunpack.c.l.b16 %v31
    %v161 = vunpack.c.l.b16 %v32
    %v162 = vunpack.c.l.b16 %v33
    %v163 = vunpack.c.l.b16 %v34
    %v164 = vunpack.c.l.b16 %v35
    %v165 = vunpack.c.l.b16 %v36
    %v166 = vunpack.c.l.b16 %v37
    %v167 = vunpack.c.l.b16 %v38
    %v168 = vunpack.c.l.b16 %v39
    %v169 = vunpack.c.l.b16 %v40
    %v170 = vunpack.c.l.b16 %v41
    %v171 = vunpack.c.l.b16 %v42
    %v172 = vunpack.c.l.b16 %v43
    %v173 = vunpack.c.l.b16 %v44
    %v174 = vunpack.c.l.b16 %v45
    %v175 = vunpack.c.l.b16 %v46
    %v176 = vunpack.c.l.b16 %v47
    %v177 = vunpack.c.l.b16 %v48
    %v178 = vunpack.c.l.b16 %v49
    %v179 = vunpack.c.l.b16 %v50
    %v180 = vunpack.c.l.b16 %v51
    %v181 = vunpack.c.l.b16 %v52
    %v182 = vunpack.c.l.b16 %v53
    %v183 = vunpack.c.l.b16 %v54
    %v184 = vunpack.c.l.b16 %v55
    %v185 = vunpack.c.l.b16 %v56
    %v186 = vunpack.c.l.b16 %v57
    %v187 = vunpack.c.l.b16 %v58
    %v188 = vunpack.c.l.b16 %v59
    %v189 = vunpack.c.l.b16 %v60
    %v190 = vunpack.c.l.b16 %v61
    %v191 = vunpack.c.l.b16 %v62
    %v192 = vunpack.c.l.b16 %v63
    %v193 = vunpack.c.l.b16 %v64
    %v194 = vunpack.c.l.b16 %v65
    %v195 = vunpack.c.l.b16 %v66
    %v196 = vunpack.c.l.b16 %v67
    %v197 = vunpack.c.l.b16 %v68
    %v198 = vunpack.c.l.b16 %v69
    %v199 = vunpack.c.l.b16 %v70
    %v200 = vunpack.c.l.b16 %v71
    %v201 = vunpack.c.l.b16 %v72
    %v202 = vunpack.c.l.b16 %v73
    %v203 = vunpack.c.l.b16 %v74
    %v204 = vunpack.c.l.b16 %v75
    %v205 = vunpack.c.l.b16 %v76
    %v206 = vunpack.c.l.b16 %v77
    %v207 = vunpack.c.l.b16 %v78
    %v208 = vunpack.c.l.b16 %v79
    %v209 = vpack.c.b16 %v146, %v145
    %v210 = vpack.c.b16 %v148, %v147
    %v211 = vpack.c.b16 %v150, %v149
    %v212 = vpack.c.b16 %v152, %v151
    %v213 = vpack.c.b16 %v154, %v153
    %v214 = vpack.c.b16 %v156, %v155
    %v215 = vpack.c.b16 %v158, %v157
    %v216 = vpack.c.b16 %v160, %v159
    %v217 = vpack.c.b16 %v162, %v161
    %v218 = vpack.c.b16 %v164, %v163
    %v219 = vpack.c.b16 %v166, %v165
    %v220 = vpack.c.b16 %v168, %v167
    %v221 = vpack.c.b16 %v170, %v169
    %v222 = vpack.c.b16 %v172, %v171
    %v223 = vpack.c.b16 %v174, %v173
    %v224 = vpack.c.b16 %v176, %v175
    %v225 = vpack.c.b16 %v178, %v177
    %v226 = vpack.c.b16 %v180, %v179
    %v227 = vpack.c.b16 %v182, %v181
    %v228 = vpack.c.b16 %v184, %v183
    %v229 = vpack.c.b16 %v186, %v185
    %v230 = vpack.c.b16 %v188, %v187
    %v231 = vpack.c.b16 %v190, %v189
    %v232 = vpack.c.b16 %v192, %v191
    %v233 = vpack.c.b16 %v194, %v193
    %v234 = vpack.c.b16 %v196, %v195
    %v235 = vpack.c.b16 %v198, %v197
    %v236 = vpack.c.b16 %v200, %v199
    %v237 = vpack.c.b16 %v202, %v201
    %v238 = vpack.c.b16 %v204, %v203
    %v239 = vpack.c.b16 %v206, %v205
    %v240 = vpack.c.b16 %v208, %v207
    %vm241 = vcmask 31744
    %v243 = vsel %vm241, %v209, 0
    %v246 = vsel %vm241, %v210, 0
    %v249 = vsel %vm241, %v211, 0
    %v252 = vsel %vm241, %v212, 0
    %v255 = vsel %vm241, %v213, 0
    %v258 = vsel %vm241, %v214, 0
    %v261 = vsel %vm241, %v215, 0
    %v264 = vsel %vm241, %v216, 0
    %v267 = vsel %vm241, %v217, 0
    %v270 = vsel %vm241, %v218, 0
    %v273 = vsel %vm241, %v219, 0
    %v276 = vsel %vm241, %v220, 0
    %v279 = vsel %vm241, %v221, 0
    %v282 = vsel %vm241, %v222, 0
    %v285 = vsel %vm241, %v223, 0
    %v288 = vsel %vm241, %v224, 0
    %v291 = vsel %vm241, %v225, 0
    %v294 = vsel %vm241, %v226, 0
    %v297 = vsel %vm241, %v227, 0
    %v300 = vsel %vm241, %v228, 0
    %v303 = vsel %vm241, %v229, 0
    %v306 = vsel %vm241, %v230, 0
    %v309 = vsel %vm241, %v231, 0
    %v312 = vsel %vm241, %v232, 0
    %v315 = vsel %vm241, %v233, 0
    %v318 = vsel %vm241, %v234, 0
    %v321 = vsel %vm241, %v235, 0
    %v324 = vsel %vm241, %v236, 0
    %v327 = vsel %vm241, %v237, 0
    %v330 = vsel %vm241, %v238, 0
    %v333 = vsel %vm241, %v239, 0
    %v336 = vsel %vm241, %v240, 0
    %vm338 = vcmask 1041408
    %v340 = vsel %vm338, %v80, 0
    %342 = vmatprep.subr.bf16.mxu0 0
    %343 = vmatpush1.bf16.msra.mxu0 0
    %344 = vmatprep.subr.bf16.mxu0 0
    %345 = vmatpush1.bf16.msra.mxu0 0
    %346 = vmatprep.subr.bf16.mxu0 0
    %347 = vmatpush1.bf16.msra.mxu0 0
    %348 = vmatprep.subr.bf16.mxu0 0
    %349 = vmatpush1.bf16.msra.mxu0 0
    %350 = vmatprep.subr.bf16.mxu0 0
    %351 = vmatpush1.bf16.msra.mxu0 0
    %352 = vmatprep.subr.bf16.mxu0 0
    %353 = vmatpush1.bf16.msra.mxu0 0
    %354 = vmatprep.subr.bf16.mxu0 0
    %355 = vmatpush1.bf16.msra.mxu0 0
    %356 = vmatprep.subr.bf16.mxu0 0
    %357 = vmatpush1.bf16.msra.mxu0 %v340
    %358 = vmatprep.subr.bf16.mxu0 0
    %359 = vmatpush2.bf16.msra.mxu0 0
    %360 = vmatprep.subr.bf16.mxu0 0
    %361 = vmatpush2.bf16.msra.mxu0 0
    %362 = vmatprep.subr.bf16.mxu0 0
    %363 = vmatpush2.bf16.msra.mxu0 0
    %364 = vmatprep.subr.bf16.mxu0 0
    %365 = vmatpush2.bf16.msra.mxu0 0
    %366 = vmatprep.subr.bf16.mxu0 0
    %367 = vmatpush2.bf16.msra.mxu0 0
    %368 = vmatprep.subr.bf16.mxu0 0
    %369 = vmatpush2.bf16.msra.mxu0 0
    %370 = vmatprep.subr.bf16.mxu0 0
    %371 = vmatpush2.bf16.msra.mxu0 0
    %372 = vmatprep.subr.bf16.mxu0 0
    %373 = vmatpush2.bf16.msra.mxu0 0
    %374 = vmatprep.mubr.bf16.mxu0 0
    %375 = vmatmul.mubr.bf16.gmra.mxu0 %v243
    %v376 = vpop.f32.mrf.mxu0
    %v377 = vadd.f32 0.0, %v376
    %v378 = vpop.f32.mrf.mxu0
    %v379 = vpop.f32.mrf.mxu0
    %v380 = vadd.f32 0.0, %v379
    %v381 = vpop.f32.mrf.mxu0
    %382 = vmatprep.mubr.bf16.mxu0 0
    %383 = vmatmul.mubr.bf16.gmra.mxu0 %v246
    %v384 = vpop.f32.mrf.mxu0
    %v385 = vadd.f32 0.0, %v384
    %v386 = vpop.f32.mrf.mxu0
    %v387 = vpop.f32.mrf.mxu0
    %v388 = vadd.f32 0.0, %v387
    %v389 = vpop.f32.mrf.mxu0
    %390 = vmatprep.mubr.bf16.mxu0 0
    %391 = vmatmul.mubr.bf16.gmra.mxu0 %v249
    %v392 = vpop.f32.mrf.mxu0
    %v393 = vadd.f32 0.0, %v392
    %v394 = vpop.f32.mrf.mxu0
    %v395 = vpop.f32.mrf.mxu0
    %v396 = vadd.f32 0.0, %v395
    %v397 = vpop.f32.mrf.mxu0
    %398 = vmatprep.mubr.bf16.mxu0 0
    %399 = vmatmul.mubr.bf16.gmra.mxu0 %v252
    %v400 = vpop.f32.mrf.mxu0
    %v401 = vadd.f32 0.0, %v400
    %v402 = vpop.f32.mrf.mxu0
    %v403 = vpop.f32.mrf.mxu0
    %v404 = vadd.f32 0.0, %v403
    %v405 = vpop.f32.mrf.mxu0
    %406 = vmatprep.mubr.bf16.mxu0 0
    %407 = vmatmul.mubr.bf16.gmra.mxu0 %v255
    %v408 = vpop.f32.mrf.mxu0
    %v409 = vadd.f32 0.0, %v408
    %v410 = vpop.f32.mrf.mxu0
    %v411 = vpop.f32.mrf.mxu0
    %v412 = vadd.f32 0.0, %v411
    %v413 = vpop.f32.mrf.mxu0
    %414 = vmatprep.mubr.bf16.mxu0 0
    %415 = vmatmul.mubr.bf16.gmra.mxu0 %v258
    %v416 = vpop.f32.mrf.mxu0
    %v417 = vadd.f32 0.0, %v416
    %v418 = vpop.f32.mrf.mxu0
    %v419 = vpop.f32.mrf.mxu0
    %v420 = vadd.f32 0.0, %v419
    %v421 = vpop.f32.mrf.mxu0
    %422 = vmatprep.mubr.bf16.mxu0 0
    %423 = vmatmul.mubr.bf16.gmra.mxu0 %v261
    %v424 = vpop.f32.mrf.mxu0
    %v425 = vadd.f32 0.0, %v424
    %v426 = vpop.f32.mrf.mxu0
    %v427 = vpop.f32.mrf.mxu0
    %v428 = vadd.f32 0.0, %v427
    %v429 = vpop.f32.mrf.mxu0
    %430 = vmatprep.mubr.bf16.mxu0 0
    %431 = vmatmul.mubr.bf16.gmra.mxu0 %v264
    %v432 = vpop.f32.mrf.mxu0
    %v433 = vadd.f32 0.0, %v432
    %v434 = vpop.f32.mrf.mxu0
    %v435 = vpop.f32.mrf.mxu0
    %v436 = vadd.f32 0.0, %v435
    %v437 = vpop.f32.mrf.mxu0
    %438 = vmatprep.mubr.bf16.mxu0 0
    %439 = vmatmul.mubr.bf16.gmra.mxu0 %v267
    %v440 = vpop.f32.mrf.mxu0
    %v441 = vadd.f32 0.0, %v440
    %v442 = vpop.f32.mrf.mxu0
    %v443 = vpop.f32.mrf.mxu0
    %v444 = vadd.f32 0.0, %v443
    %v445 = vpop.f32.mrf.mxu0
    %446 = vmatprep.mubr.bf16.mxu0 0
    %447 = vmatmul.mubr.bf16.gmra.mxu0 %v270
    %v448 = vpop.f32.mrf.mxu0
    %v449 = vadd.f32 0.0, %v448
    %v450 = vpop.f32.mrf.mxu0
    %v451 = vpop.f32.mrf.mxu0
    %v452 = vadd.f32 0.0, %v451
    %v453 = vpop.f32.mrf.mxu0
    %454 = vmatprep.mubr.bf16.mxu0 0
    %455 = vmatmul.mubr.bf16.gmra.mxu0 %v273
    %v456 = vpop.f32.mrf.mxu0
    %v457 = vadd.f32 0.0, %v456
    %v458 = vpop.f32.mrf.mxu0
    %v459 = vpop.f32.mrf.mxu0
    %v460 = vadd.f32 0.0, %v459
    %v461 = vpop.f32.mrf.mxu0
    %462 = vmatprep.mubr.bf16.mxu0 0
    %463 = vmatmul.mubr.bf16.gmra.mxu0 %v276
    %v464 = vpop.f32.mrf.mxu0
    %v465 = vadd.f32 0.0, %v464
    %v466 = vpop.f32.mrf.mxu0
    %v467 = vpop.f32.mrf.mxu0
    %v468 = vadd.f32 0.0, %v467
    %v469 = vpop.f32.mrf.mxu0
    %470 = vmatprep.mubr.bf16.mxu0 0
    %471 = vmatmul.mubr.bf16.gmra.mxu0 %v279
    %v472 = vpop.f32.mrf.mxu0
    %v473 = vadd.f32 0.0, %v472
    %v474 = vpop.f32.mrf.mxu0
    %v475 = vpop.f32.mrf.mxu0
    %v476 = vadd.f32 0.0, %v475
    %v477 = vpop.f32.mrf.mxu0
    %478 = vmatprep.mubr.bf16.mxu0 0
    %479 = vmatmul.mubr.bf16.gmra.mxu0 %v282
    %v480 = vpop.f32.mrf.mxu0
    %v481 = vadd.f32 0.0, %v480
    %v482 = vpop.f32.mrf.mxu0
    %v483 = vpop.f32.mrf.mxu0
    %v484 = vadd.f32 0.0, %v483
    %v485 = vpop.f32.mrf.mxu0
    %486 = vmatprep.mubr.bf16.mxu0 0
    %487 = vmatmul.mubr.bf16.gmra.mxu0 %v285
    %v488 = vpop.f32.mrf.mxu0
    %v489 = vadd.f32 0.0, %v488
    %v490 = vpop.f32.mrf.mxu0
    %v491 = vpop.f32.mrf.mxu0
    %v492 = vadd.f32 0.0, %v491
    %v493 = vpop.f32.mrf.mxu0
    %494 = vmatprep.mubr.bf16.mxu0 0
    %495 = vmatmul.mubr.bf16.gmra.mxu0 %v288
    %v496 = vpop.f32.mrf.mxu0
    %v497 = vadd.f32 0.0, %v496
    %v498 = vpop.f32.mrf.mxu0
    %v499 = vpop.f32.mrf.mxu0
    %v500 = vadd.f32 0.0, %v499
    %v501 = vpop.f32.mrf.mxu0
    %502 = vmatprep.mubr.bf16.mxu0 0
    %503 = vmatmul.mubr.bf16.gmra.mxu0 %v291
    %v504 = vpop.f32.mrf.mxu0
    %v505 = vadd.f32 0.0, %v504
    %v506 = vpop.f32.mrf.mxu0
    %v507 = vpop.f32.mrf.mxu0
    %v508 = vadd.f32 0.0, %v507
    %v509 = vpop.f32.mrf.mxu0
    %510 = vmatprep.mubr.bf16.mxu0 0
    %511 = vmatmul.mubr.bf16.gmra.mxu0 %v294
    %v512 = vpop.f32.mrf.mxu0
    %v513 = vadd.f32 0.0, %v512
    %v514 = vpop.f32.mrf.mxu0
    %v515 = vpop.f32.mrf.mxu0
    %v516 = vadd.f32 0.0, %v515
    %v517 = vpop.f32.mrf.mxu0
    %518 = vmatprep.mubr.bf16.mxu0 0
    %519 = vmatmul.mubr.bf16.gmra.mxu0 %v297
    %v520 = vpop.f32.mrf.mxu0
    %v521 = vadd.f32 0.0, %v520
    %v522 = vpop.f32.mrf.mxu0
    %v523 = vpop.f32.mrf.mxu0
    %v524 = vadd.f32 0.0, %v523
    %v525 = vpop.f32.mrf.mxu0
    %526 = vmatprep.mubr.bf16.mxu0 0
    %527 = vmatmul.mubr.bf16.gmra.mxu0 %v300
    %v528 = vpop.f32.mrf.mxu0
    %v529 = vadd.f32 0.0, %v528
    %v530 = vpop.f32.mrf.mxu0
    %v531 = vpop.f32.mrf.mxu0
    %v532 = vadd.f32 0.0, %v531
    %v533 = vpop.f32.mrf.mxu0
    %534 = vmatprep.mubr.bf16.mxu0 0
    %535 = vmatmul.mubr.bf16.gmra.mxu0 %v303
    %v536 = vpop.f32.mrf.mxu0
    %v537 = vadd.f32 0.0, %v536
    %v538 = vpop.f32.mrf.mxu0
    %v539 = vpop.f32.mrf.mxu0
    %v540 = vadd.f32 0.0, %v539
    %v541 = vpop.f32.mrf.mxu0
    %542 = vmatprep.mubr.bf16.mxu0 0
    %543 = vmatmul.mubr.bf16.gmra.mxu0 %v306
    %v544 = vpop.f32.mrf.mxu0
    %v545 = vadd.f32 0.0, %v544
    %v546 = vpop.f32.mrf.mxu0
    %v547 = vpop.f32.mrf.mxu0
    %v548 = vadd.f32 0.0, %v547
    %v549 = vpop.f32.mrf.mxu0
    %550 = vmatprep.mubr.bf16.mxu0 0
    %551 = vmatmul.mubr.bf16.gmra.mxu0 %v309
    %v552 = vpop.f32.mrf.mxu0
    %v553 = vadd.f32 0.0, %v552
    %v554 = vpop.f32.mrf.mxu0
    %v555 = vpop.f32.mrf.mxu0
    %v556 = vadd.f32 0.0, %v555
    %v557 = vpop.f32.mrf.mxu0
    %558 = vmatprep.mubr.bf16.mxu0 0
    %559 = vmatmul.mubr.bf16.gmra.mxu0 %v312
    %v560 = vpop.f32.mrf.mxu0
    %v561 = vadd.f32 0.0, %v560
    %v562 = vpop.f32.mrf.mxu0
    %v563 = vpop.f32.mrf.mxu0
    %v564 = vadd.f32 0.0, %v563
    %v565 = vpop.f32.mrf.mxu0
    %566 = vmatprep.mubr.bf16.mxu0 0
    %567 = vmatmul.mubr.bf16.gmra.mxu0 %v315
    %v568 = vpop.f32.mrf.mxu0
    %v569 = vadd.f32 0.0, %v568
    %v570 = vpop.f32.mrf.mxu0
    %v571 = vpop.f32.mrf.mxu0
    %v572 = vadd.f32 0.0, %v571
    %v573 = vpop.f32.mrf.mxu0
    %574 = vmatprep.mubr.bf16.mxu0 0
    %575 = vmatmul.mubr.bf16.gmra.mxu0 %v318
    %v576 = vpop.f32.mrf.mxu0
    %v577 = vadd.f32 0.0, %v576
    %v578 = vpop.f32.mrf.mxu0
    %v579 = vpop.f32.mrf.mxu0
    %v580 = vadd.f32 0.0, %v579
    %v581 = vpop.f32.mrf.mxu0
    %582 = vmatprep.mubr.bf16.mxu0 0
    %583 = vmatmul.mubr.bf16.gmra.mxu0 %v321
    %v584 = vpop.f32.mrf.mxu0
    %v585 = vadd.f32 0.0, %v584
    %v586 = vpop.f32.mrf.mxu0
    %v587 = vpop.f32.mrf.mxu0
    %v588 = vadd.f32 0.0, %v587
    %v589 = vpop.f32.mrf.mxu0
    %590 = vmatprep.mubr.bf16.mxu0 0
    %591 = vmatmul.mubr.bf16.gmra.mxu0 %v324
    %v592 = vpop.f32.mrf.mxu0
    %v593 = vadd.f32 0.0, %v592
    %v594 = vpop.f32.mrf.mxu0
    %v595 = vpop.f32.mrf.mxu0
    %v596 = vadd.f32 0.0, %v595
    %v597 = vpop.f32.mrf.mxu0
    %598 = vmatprep.mubr.bf16.mxu0 0
    %599 = vmatmul.mubr.bf16.gmra.mxu0 %v327
    %v600 = vpop.f32.mrf.mxu0
    %v601 = vadd.f32 0.0, %v600
    %v602 = vpop.f32.mrf.mxu0
    %v603 = vpop.f32.mrf.mxu0
    %v604 = vadd.f32 0.0, %v603
    %v605 = vpop.f32.mrf.mxu0
    %606 = vmatprep.mubr.bf16.mxu0 0
    %607 = vmatmul.mubr.bf16.gmra.mxu0 %v330
    %v608 = vpop.f32.mrf.mxu0
    %v609 = vadd.f32 0.0, %v608
    %v610 = vpop.f32.mrf.mxu0
    %v611 = vpop.f32.mrf.mxu0
    %v612 = vadd.f32 0.0, %v611
    %v613 = vpop.f32.mrf.mxu0
    %614 = vmatprep.mubr.bf16.mxu0 0
    %615 = vmatmul.mubr.bf16.gmra.mxu0 %v333
    %v616 = vpop.f32.mrf.mxu0
    %v617 = vadd.f32 0.0, %v616
    %v618 = vpop.f32.mrf.mxu0
    %v619 = vpop.f32.mrf.mxu0
    %v620 = vadd.f32 0.0, %v619
    %v621 = vpop.f32.mrf.mxu0
    %622 = vmatprep.mubr.bf16.mxu0 0
    %623 = vmatmul.mubr.bf16.gmra.mxu0 %v336
    %v624 = vpop.f32.mrf.mxu0
    %v625 = vadd.f32 0.0, %v624
    %v626 = vpop.f32.mrf.mxu0
    %v627 = vpop.f32.mrf.mxu0
    %v628 = vadd.f32 0.0, %v627
    %v629 = vpop.f32.mrf.mxu0
    %630 = vdwg.mxu0
    %p631 = scmp.eq.s32.totalorder 0, 0
    // Predicated region
    $region10: #{tpu_custom_call.1} parent=1 // pred_check
      %p632 = pneg %p631
    $region11: #{tpu_custom_call.1} parent=1 // pred_check_branch
      %634 = sbr.rel (%p632) target = $region13
    $region12: #{tpu_custom_call.1} parent=1 // pred_region
      %vm635 = vcmask 57344
      %636 = vst.msk [vmem:[#allocation2] sm:$0x1] %vm635, 0.0
      %637 = vst.msk [vmem:[#allocation4] sm:$0x1] %vm635, 0.0
    $region13: #{tpu_custom_call.1} parent=1 // pred_fallthru
      _
    %v638 = vld [vmem:[#allocation2] sm:$0x1]
    %vm639 = vcmask 64512
    %v640 = vsel %vm639, %v377, 0.0
    %v641 = vsel %vm639, %v380, 0.0
    %v642 = vadd.f32 %v640, %v641
    %v643 = vsel %vm639, %v385, 0.0
    %v644 = vadd.f32 %v642, %v643
    %v645 = vsel %vm639, %v388, 0.0
    %v646 = vadd.f32 %v644, %v645
    %v647 = vsel %vm639, %v393, 0.0
    %v648 = vadd.f32 %v646, %v647
    %v649 = vsel %vm639, %v396, 0.0
    %v650 = vadd.f32 %v648, %v649
    %v651 = vsel %vm639, %v401, 0.0
    %v652 = vadd.f32 %v650, %v651
    %v653 = vsel %vm639, %v404, 0.0
    %v654 = vadd.f32 %v652, %v653
    %v655 = vsel %vm639, %v409, 0.0
    %v656 = vadd.f32 %v654, %v655
    %v657 = vsel %vm639, %v412, 0.0
    %v658 = vadd.f32 %v656, %v657
    %v659 = vsel %vm639, %v417, 0.0
    %v660 = vadd.f32 %v658, %v659
    %v661 = vsel %vm639, %v420, 0.0
    %v662 = vadd.f32 %v660, %v661
    %v663 = vsel %vm639, %v425, 0.0
    %v664 = vadd.f32 %v662, %v663
    %v665 = vsel %vm639, %v428, 0.0
    %v666 = vadd.f32 %v664, %v665
    %v667 = vsel %vm639, %v433, 0.0
    %v668 = vadd.f32 %v666, %v667
    %v669 = vsel %vm639, %v436, 0.0
    %v670 = vadd.f32 %v668, %v669
    %v671 = vsel %vm639, %v441, 0.0
    %v672 = vadd.f32 %v670, %v671
    %v673 = vsel %vm639, %v444, 0.0
    %v674 = vadd.f32 %v672, %v673
    %v675 = vsel %vm639, %v449, 0.0
    %v676 = vadd.f32 %v674, %v675
    %v677 = vsel %vm639, %v452, 0.0
    %v678 = vadd.f32 %v676, %v677
    %v679 = vsel %vm639, %v457, 0.0
    %v680 = vadd.f32 %v678, %v679
    %v681 = vsel %vm639, %v460, 0.0
    %v682 = vadd.f32 %v680, %v681
    %v683 = vsel %vm639, %v465, 0.0
    %v684 = vadd.f32 %v682, %v683
    %v685 = vsel %vm639, %v468, 0.0
    %v686 = vadd.f32 %v684, %v685
    %v687 = vsel %vm639, %v473, 0.0
    %v688 = vadd.f32 %v686, %v687
    %v689 = vsel %vm639, %v476, 0.0
    %v690 = vadd.f32 %v688, %v689
    %v691 = vsel %vm639, %v481, 0.0
    %v692 = vadd.f32 %v690, %v691
    %v693 = vsel %vm639, %v484, 0.0
    %v694 = vadd.f32 %v692, %v693
    %v695 = vsel %vm639, %v489, 0.0
    %v696 = vadd.f32 %v694, %v695
    %v697 = vsel %vm639, %v492, 0.0
    %v698 = vadd.f32 %v696, %v697
    %v699 = vsel %vm639, %v497, 0.0
    %v700 = vadd.f32 %v698, %v699
    %v701 = vsel %vm639, %v500, 0.0
    %v702 = vadd.f32 %v700, %v701
    %v703 = vsel %vm639, %v505, 0.0
    %v704 = vadd.f32 %v702, %v703
    %v705 = vsel %vm639, %v508, 0.0
    %v706 = vadd.f32 %v704, %v705
    %v707 = vsel %vm639, %v513, 0.0
    %v708 = vadd.f32 %v706, %v707
    %v709 = vsel %vm639, %v516, 0.0
    %v710 = vadd.f32 %v708, %v709
    %v711 = vsel %vm639, %v521, 0.0
    %v712 = vadd.f32 %v710, %v711
    %v713 = vsel %vm639, %v524, 0.0
    %v714 = vadd.f32 %v712, %v713
    %v715 = vsel %vm639, %v529, 0.0
    %v716 = vadd.f32 %v714, %v715
    %v717 = vsel %vm639, %v532, 0.0
    %v718 = vadd.f32 %v716, %v717
    %v719 = vsel %vm639, %v537, 0.0
    %v720 = vadd.f32 %v718, %v719
    %v721 = vsel %vm639, %v540, 0.0
    %v722 = vadd.f32 %v720, %v721
    %v723 = vsel %vm639, %v545, 0.0
    %v724 = vadd.f32 %v722, %v723
    %v725 = vsel %vm639, %v548, 0.0
    %v726 = vadd.f32 %v724, %v725
    %v727 = vsel %vm639, %v553, 0.0
    %v728 = vadd.f32 %v726, %v727
    %v729 = vsel %vm639, %v556, 0.0
    %v730 = vadd.f32 %v728, %v729
    %v731 = vsel %vm639, %v561, 0.0
    %v732 = vadd.f32 %v730, %v731
    %v733 = vsel %vm639, %v564, 0.0
    %v734 = vadd.f32 %v732, %v733
    %v735 = vsel %vm639, %v569, 0.0
    %v736 = vadd.f32 %v734, %v735
    %v737 = vsel %vm639, %v572, 0.0
    %v738 = vadd.f32 %v736, %v737
    %v739 = vsel %vm639, %v577, 0.0
    %v740 = vadd.f32 %v738, %v739
    %v741 = vsel %vm639, %v580, 0.0
    %v742 = vadd.f32 %v740, %v741
    %v743 = vsel %vm639, %v585, 0.0
    %v744 = vadd.f32 %v742, %v743
    %v745 = vsel %vm639, %v588, 0.0
    %v746 = vadd.f32 %v744, %v745
    %v747 = vsel %vm639, %v593, 0.0
    %v748 = vadd.f32 %v746, %v747
    %v749 = vsel %vm639, %v596, 0.0
    %v750 = vadd.f32 %v748, %v749
    %v751 = vsel %vm639, %v601, 0.0
    %v752 = vadd.f32 %v750, %v751
    %v753 = vsel %vm639, %v604, 0.0
    %v754 = vadd.f32 %v752, %v753
    %v755 = vsel %vm639, %v609, 0.0
    %v756 = vadd.f32 %v754, %v755
    %v757 = vsel %vm639, %v612, 0.0
    %v758 = vadd.f32 %v756, %v757
    %v759 = vsel %vm639, %v617, 0.0
    %v760 = vadd.f32 %v758, %v759
    %v761 = vsel %vm639, %v620, 0.0
    %v762 = vadd.f32 %v760, %v761
    %v763 = vsel %vm639, %v625, 0.0
    %v764 = vadd.f32 %v762, %v763
    %v765 = vsel %vm639, %v628, 0.0
    %v766 = vadd.f32 %v764, %v765
    %v767 = vrot.slane %v766, 4
    %v768 = vadd.f32 %v766, %v767
    %v769 = vrot.slane %v768, 2
    %v770 = vadd.f32 %v768, %v769
    %v771 = vrot.slane %v770, 1
    %v772 = vadd.f32 %v770, %v771
    %v773 = vadd.f32 %v638, %v772
    %vm774 = vcmask 57344
    %775 = vst.msk [vmem:[#allocation2] sm:$0x1] %vm774, %v773
    %v776 = vld [vmem:[#allocation4] sm:$0x1]
    %v777 = vmul.f32 %v377, %v377
    %v778 = vmul.f32 %v380, %v380
    %v779 = vmul.f32 %v385, %v385
    %v780 = vmul.f32 %v388, %v388
    %v781 = vmul.f32 %v393, %v393
    %v782 = vmul.f32 %v396, %v396
    %v783 = vmul.f32 %v401, %v401
    %v784 = vmul.f32 %v404, %v404
    %v785 = vmul.f32 %v409, %v409
    %v786 = vmul.f32 %v412, %v412
    %v787 = vmul.f32 %v417, %v417
    %v788 = vmul.f32 %v420, %v420
    %v789 = vmul.f32 %v425, %v425
    %v790 = vmul.f32 %v428, %v428
    %v791 = vmul.f32 %v433, %v433
    %v792 = vmul.f32 %v436, %v436
    %v793 = vmul.f32 %v441, %v441
    %v794 = vmul.f32 %v444, %v444
    %v795 = vmul.f32 %v449, %v449
    %v796 = vmul.f32 %v452, %v452
    %v797 = vmul.f32 %v457, %v457
    %v798 = vmul.f32 %v460, %v460
    %v799 = vmul.f32 %v465, %v465
    %v800 = vmul.f32 %v468, %v468
    %v801 = vmul.f32 %v473, %v473
    %v802 = vmul.f32 %v476, %v476
    %v803 = vmul.f32 %v481, %v481
    %v804 = vmul.f32 %v484, %v484
    %v805 = vmul.f32 %v489, %v489
    %v806 = vmul.f32 %v492, %v492
    %v807 = vmul.f32 %v497, %v497
    %v808 = vmul.f32 %v500, %v500
    %v809 = vmul.f32 %v505, %v505
    %v810 = vmul.f32 %v508, %v508
    %v811 = vmul.f32 %v513, %v513
    %v812 = vmul.f32 %v516, %v516
    %v813 = vmul.f32 %v521, %v521
    %v814 = vmul.f32 %v524, %v524
    %v815 = vmul.f32 %v529, %v529
    %v816 = vmul.f32 %v532, %v532
    %v817 = vmul.f32 %v537, %v537
    %v818 = vmul.f32 %v540, %v540
    %v819 = vmul.f32 %v545, %v545
    %v820 = vmul.f32 %v548, %v548
    %v821 = vmul.f32 %v553, %v553
    %v822 = vmul.f32 %v556, %v556
    %v823 = vmul.f32 %v561, %v561
    %v824 = vmul.f32 %v564, %v564
    %v825 = vmul.f32 %v569, %v569
    %v826 = vmul.f32 %v572, %v572
    %v827 = vmul.f32 %v577, %v577
    %v828 = vmul.f32 %v580, %v580
    %v829 = vmul.f32 %v585, %v585
    %v830 = vmul.f32 %v588, %v588
    %v831 = vmul.f32 %v593, %v593
    %v832 = vmul.f32 %v596, %v596
    %v833 = vmul.f32 %v601, %v601
    %v834 = vmul.f32 %v604, %v604
    %v835 = vmul.f32 %v609, %v609
    %v836 = vmul.f32 %v612, %v612
    %v837 = vmul.f32 %v617, %v617
    %v838 = vmul.f32 %v620, %v620
    %v839 = vmul.f32 %v625, %v625
    %v840 = vmul.f32 %v628, %v628
    %v841 = vsel %vm639, %v777, 0.0
    %v842 = vsel %vm639, %v778, 0.0
    %v843 = vadd.f32 %v841, %v842
    %v844 = vsel %vm639, %v779, 0.0
    %v845 = vadd.f32 %v843, %v844
    %v846 = vsel %vm639, %v780, 0.0
    %v847 = vadd.f32 %v845, %v846
    %v848 = vsel %vm639, %v781, 0.0
    %v849 = vadd.f32 %v847, %v848
    %v850 = vsel %vm639, %v782, 0.0
    %v851 = vadd.f32 %v849, %v850
    %v852 = vsel %vm639, %v783, 0.0
    %v853 = vadd.f32 %v851, %v852
    %v854 = vsel %vm639, %v784, 0.0
    %v855 = vadd.f32 %v853, %v854
    %v856 = vsel %vm639, %v785, 0.0
    %v857 = vadd.f32 %v855, %v856
    %v858 = vsel %vm639, %v786, 0.0
    %v859 = vadd.f32 %v857, %v858
    %v860 = vsel %vm639, %v787, 0.0
    %v861 = vadd.f32 %v859, %v860
    %v862 = vsel %vm639, %v788, 0.0
    %v863 = vadd.f32 %v861, %v862
    %v864 = vsel %vm639, %v789, 0.0
    %v865 = vadd.f32 %v863, %v864
    %v866 = vsel %vm639, %v790, 0.0
    %v867 = vadd.f32 %v865, %v866
    %v868 = vsel %vm639, %v791, 0.0
    %v869 = vadd.f32 %v867, %v868
    %v870 = vsel %vm639, %v792, 0.0
    %v871 = vadd.f32 %v869, %v870
    %v872 = vsel %vm639, %v793, 0.0
    %v873 = vadd.f32 %v871, %v872
    %v874 = vsel %vm639, %v794, 0.0
    %v875 = vadd.f32 %v873, %v874
    %v876 = vsel %vm639, %v795, 0.0
    %v877 = vadd.f32 %v875, %v876
    %v878 = vsel %vm639, %v796, 0.0
    %v879 = vadd.f32 %v877, %v878
    %v880 = vsel %vm639, %v797, 0.0
    %v881 = vadd.f32 %v879, %v880
    %v882 = vsel %vm639, %v798, 0.0
    %v883 = vadd.f32 %v881, %v882
    %v884 = vsel %vm639, %v799, 0.0
    %v885 = vadd.f32 %v883, %v884
    %v886 = vsel %vm639, %v800, 0.0
    %v887 = vadd.f32 %v885, %v886
    %v888 = vsel %vm639, %v801, 0.0
    %v889 = vadd.f32 %v887, %v888
    %v890 = vsel %vm639, %v802, 0.0
    %v891 = vadd.f32 %v889, %v890
    %v892 = vsel %vm639, %v803, 0.0
    %v893 = vadd.f32 %v891, %v892
    %v894 = vsel %vm639, %v804, 0.0
    %v895 = vadd.f32 %v893, %v894
    %v896 = vsel %vm639, %v805, 0.0
    %v897 = vadd.f32 %v895, %v896
    %v898 = vsel %vm639, %v806, 0.0
    %v899 = vadd.f32 %v897, %v898
    %v900 = vsel %vm639, %v807, 0.0
    %v901 = vadd.f32 %v899, %v900
    %v902 = vsel %vm639, %v808, 0.0
    %v903 = vadd.f32 %v901, %v902
    %v904 = vsel %vm639, %v809, 0.0
    %v905 = vadd.f32 %v903, %v904
    %v906 = vsel %vm639, %v810, 0.0
    %v907 = vadd.f32 %v905, %v906
    %v908 = vsel %vm639, %v811, 0.0
    %v909 = vadd.f32 %v907, %v908
    %v910 = vsel %vm639, %v812, 0.0
    %v911 = vadd.f32 %v909, %v910
    %v912 = vsel %vm639, %v813, 0.0
    %v913 = vadd.f32 %v911, %v912
    %v914 = vsel %vm639, %v814, 0.0
    %v915 = vadd.f32 %v913, %v914
    %v916 = vsel %vm639, %v815, 0.0
    %v917 = vadd.f32 %v915, %v916
    %v918 = vsel %vm639, %v816, 0.0
    %v919 = vadd.f32 %v917, %v918
    %v920 = vsel %vm639, %v817, 0.0
    %v921 = vadd.f32 %v919, %v920
    %v922 = vsel %vm639, %v818, 0.0
    %v923 = vadd.f32 %v921, %v922
    %v924 = vsel %vm639, %v819, 0.0
    %v925 = vadd.f32 %v923, %v924
    %v926 = vsel %vm639, %v820, 0.0
    %v927 = vadd.f32 %v925, %v926
    %v928 = vsel %vm639, %v821, 0.0
    %v929 = vadd.f32 %v927, %v928
    %v930 = vsel %vm639, %v822, 0.0
    %v931 = vadd.f32 %v929, %v930
    %v932 = vsel %vm639, %v823, 0.0
    %v933 = vadd.f32 %v931, %v932
    %v934 = vsel %vm639, %v824, 0.0
    %v935 = vadd.f32 %v933, %v934
    %v936 = vsel %vm639, %v825, 0.0
    %v937 = vadd.f32 %v935, %v936
    %v938 = vsel %vm639, %v826, 0.0
    %v939 = vadd.f32 %v937, %v938
    %v940 = vsel %vm639, %v827, 0.0
    %v941 = vadd.f32 %v939, %v940
    %v942 = vsel %vm639, %v828, 0.0
    %v943 = vadd.f32 %v941, %v942
    %v944 = vsel %vm639, %v829, 0.0
    %v945 = vadd.f32 %v943, %v944
    %v946 = vsel %vm639, %v830, 0.0
    %v947 = vadd.f32 %v945, %v946
    %v948 = vsel %vm639, %v831, 0.0
    %v949 = vadd.f32 %v947, %v948
    %v950 = vsel %vm639, %v832, 0.0
    %v951 = vadd.f32 %v949, %v950
    %v952 = vsel %vm639, %v833, 0.0
    %v953 = vadd.f32 %v951, %v952
    %v954 = vsel %vm639, %v834, 0.0
    %v955 = vadd.f32 %v953, %v954
    %v956 = vsel %vm639, %v835, 0.0
    %v957 = vadd.f32 %v955, %v956
    %v958 = vsel %vm639, %v836, 0.0
    %v959 = vadd.f32 %v957, %v958
    %v960 = vsel %vm639, %v837, 0.0
    %v961 = vadd.f32 %v959, %v960
    %v962 = vsel %vm639, %v838, 0.0
    %v963 = vadd.f32 %v961, %v962
    %v964 = vsel %vm639, %v839, 0.0
    %v965 = vadd.f32 %v963, %v964
    %v966 = vsel %vm639, %v840, 0.0
    %v967 = vadd.f32 %v965, %v966
    %v968 = vrot.slane %v967, 4
    %v969 = vadd.f32 %v967, %v968
    %v970 = vrot.slane %v969, 2
    %v971 = vadd.f32 %v969, %v970
    %v972 = vrot.slane %v971, 1
    %v973 = vadd.f32 %v971, %v972
    %v974 = vadd.f32 %v776, %v973
    %975 = vst.msk [vmem:[#allocation4] sm:$0x1] %vm774, %v974
    // Predicated region
    $region14: #{tpu_custom_call.1} parent=1 // pred_check
      _
    $region15: #{tpu_custom_call.1} parent=1 // pred_check_branch
      %977 = sbr.rel (0) target = $region17
    $region16: #{tpu_custom_call.1} parent=1 // pred_region
      %s979 = ssub.s32 16, 16
      %980 = vsyncadd [#allocation3], %s979
      %s982 = sshll.u32 [#allocation2], 4
      %s983 = int_to_ptr.vmem [resolvable:$true] %s982
      %985 = dma.vmem_to_hbm [thread:$0]  %s983, 16, %s2, [#allocation3]
    $region17: #{tpu_custom_call.1} parent=1 // pred_fallthru
      _
    // Predicated region
    $region18: #{tpu_custom_call.1} parent=1 // pred_check
      _
    $region19: #{tpu_custom_call.1} parent=1 // pred_check_branch
      %987 = sbr.rel (0) target = $region21
    $region20: #{tpu_custom_call.1} parent=1 // pred_region
      %s989 = ssub.s32 16, 16
      %990 = vsyncadd [#allocation5], %s989
      %s992 = sshll.u32 [#allocation4], 4
      %s993 = int_to_ptr.vmem [resolvable:$true] %s992
      %995 = dma.vmem_to_hbm [thread:$0]  %s993, 16, %s3, [#allocation5]
    $region21: #{tpu_custom_call.1} parent=1 // pred_fallthru
      _
    // Predicated region
    $region22: #{tpu_custom_call.1} parent=1 // pred_check
      _
    $region23: #{tpu_custom_call.1} parent=1 // pred_check_branch
      %997 = sbr.rel (0) target = $region25
    $region24: #{tpu_custom_call.1} parent=1 // pred_region
      %998 = dma.done [#allocation3], 16
    $region25: #{tpu_custom_call.1} parent=1 // pred_fallthru
      _
    // Predicated region
    $region26: #{tpu_custom_call.1} parent=1 // pred_check
      _
    $region27: #{tpu_custom_call.1} parent=1 // pred_check_branch
      %1000 = sbr.rel (0) target = $region29
    $region28: #{tpu_custom_call.1} parent=1 // pred_region
      %1001 = dma.done [#allocation5], 16
    $region29: #{tpu_custom_call.1} parent=1 // pred_fallthru
      _
    %1002 = vsyncpa [#allocation3], 1
    %1003 = vsyncpa [#allocation5], 1

</llo_original>
